<compile_context>
chip_gen: v6e
topology: v6e:2x2x1
jax: 0.10.0
libtpu: 0.0.40
codegen_flags: <defaults>
</compile_context>

<pallas_src>
import jax
import jax.numpy as jnp
from jax.experimental import pallas as pl
from jax.experimental.pallas import tpu as pltpu

LN_EPS = 1e-5  # torch.nn.LayerNorm default


def _make_kernel(C, tile_t, K, use_im2col):
    halo_w = K - 1

    def compute(xc, hl, w_ref, b_ref, g_ref, be_ref, m, o_ref):
        # xc: (C, tile_t) mxu dtype; hl: (C, K-1) or None; m: (1, tile_t) f32
        if halo_w > 0:
            window = jnp.concatenate([xc, hl], axis=1)          # (C, tile_t+K-1)
        else:
            window = xc

        if use_im2col:
            # Small C: deepen the MXU contraction to K*C with an im2col RHS.
            if K > 1:
                xcol = jnp.concatenate(
                    [window[:, k:k + tile_t] for k in range(K)], axis=0)
            else:
                xcol = window
            acc = jnp.dot(w_ref[...], xcol, preferred_element_type=jnp.float32)
        else:
            # C already saturates MXU depth: K accumulated (C, C) matmuls.
            acc = jnp.dot(w_ref[0], window[:, 0:tile_t],
                          preferred_element_type=jnp.float32)
            for k in range(1, K):
                acc = acc + jnp.dot(w_ref[k], window[:, k:k + tile_t],
                                    preferred_element_type=jnp.float32)

        acc = acc + b_ref[...]           # (C, 1) broadcasts over T
        acc = jnp.maximum(acc, 0.0)      # ReLU

        # ChannelFirstLayerNorm over channels (sublane axis), two-pass stats.
        inv_c = 1.0 / C
        mean = jnp.sum(acc, axis=0, keepdims=True) * inv_c       # (1, tile_t)
        cent = acc - mean
        var = jnp.sum(cent * cent, axis=0, keepdims=True) * inv_c
        y = cent * jax.lax.rsqrt(var + LN_EPS)
        y = y * g_ref[...] + be_ref[...]

        # Dropout: eval mode -> identity.

        y = y * m                        # (1, tile_t) broadcasts over C
        o_ref[0] = y.astype(o_ref.dtype)

    if halo_w > 0:
        def kernel(x_ref, h_ref, w_ref, b_ref, g_ref, be_ref, m_ref, o_ref):
            compute(x_ref[0], h_ref[0, 0], w_ref, b_ref, g_ref, be_ref,
                    m_ref[0], o_ref)
    else:
        def kernel(x_ref, w_ref, b_ref, g_ref, be_ref, m_ref, o_ref):
            compute(x_ref[0], None, w_ref, b_ref, g_ref, be_ref,
                    m_ref[0], o_ref)
    return kernel


def _vmem_capacity_bytes():
    try:
        return int(pltpu.get_tpu_info().vmem_capacity_bytes)
    except Exception:
        return 64 * 1024 * 1024  # conservative default (v7x physical VMEM)


def _pick_tile_t(T, C, K, mxu_itemsize, use_im2col, vmem_cap):
    """Largest multiple-of-128 time tile whose working set fits ~1/4 of VMEM."""
    budget = vmem_cap // 4
    # Rough bytes per output column: double-buffered in/out tiles + f32 temps.
    col = C * (2 * mxu_itemsize + 2 * 4) + 4 * C * 4
    if use_im2col:
        col += K * C * mxu_itemsize      # im2col RHS
    else:
        col += C * mxu_itemsize          # stitched window copy
    tile = max(128, (budget // max(col, 1)) // 128 * 128)
    tile = min(tile, 1024)
    t_round = 128 * pl.cdiv(T, 128)
    return int(min(tile, t_round))


def basic_layer(x, mask, weight, bias, gamma, beta, *,
                tile_t=None, mxu_dtype=jnp.bfloat16):
    """Fused BasicLayer forward (eval mode).

    x: (B, C, T) float32 channel-first, mask: (B, 1, T). Returns (B, C, T).
    """
    B, C, T = x.shape
    C_out, C_in, K = weight.shape
    assert C_out == C and C_in == C
    assert K % 2 == 1, ("even kernel_size changes PyTorch's output length "
                        "(padding=K//2); only odd K is supported")
    pad = K // 2

    use_im2col = C < 128  # below MXU contraction depth -> deepen via im2col
    mxu_itemsize = jnp.dtype(mxu_dtype).itemsize
    vmem_cap = _vmem_capacity_bytes()

    if tile_t is None:
        tile_t = _pick_tile_t(T, C, K, mxu_itemsize, use_im2col, vmem_cap)
    assert tile_t % 128 == 0, "tile_t must be lane-dense (multiple of 128)"

    n_t = pl.cdiv(T, tile_t)
    t_round = n_t * tile_t

    # 'same' zero padding + rounding T up to the tile grid, done ONCE in the
    # wrapper; conv operands cast to the MXU dtype here so their HBM->VMEM
    # traffic is halved when mxu_dtype is bf16.
    xp = jnp.pad(x, ((0, 0), (0, 0), (pad, pad + t_round - T))).astype(mxu_dtype)
    x_center = xp[:, :, :t_round]                               # (B, C, t_round)
    args = [x_center]
    in_specs = [pl.BlockSpec((1, C, tile_t), lambda b, t: (b, 0, t))]

    if K > 1:
        # Right halo of K-1 columns per time tile (head of the next tile or
        # the trailing zero pad). Extra HBM bytes: (K-1)/tile_t of x.
        halo = jnp.stack(
            [xp[:, :, (t + 1) * tile_t:(t + 1) * tile_t + (K - 1)]
             for t in range(n_t)], axis=1)                      # (B, nT, C, K-1)
        args.append(halo)
        in_specs.append(pl.BlockSpec((1, 1, C, K - 1), lambda b, t: (b, t, 0, 0)))

    # Conv weight layout per path.
    if use_im2col:
        # w2[o, k*C + i] = weight[o, i, k]  (matches im2col row order)
        w_arg = jnp.transpose(weight, (0, 2, 1)).reshape(C, K * C).astype(mxu_dtype)
        w_spec = pl.BlockSpec((C, K * C), lambda b, t: (0, 0))
    else:
        # w_arg[k] = weight[:, :, k], an (C_out, C_in) slab per tap
        w_arg = jnp.transpose(weight, (2, 0, 1)).astype(mxu_dtype)  # (K, C, C)
        w_spec = pl.BlockSpec((K, C, C), lambda b, t: (0, 0, 0))
    args.append(w_arg)
    in_specs.append(w_spec)

    b2 = bias.reshape(C, 1).astype(jnp.float32)
    g2 = gamma.reshape(C, 1).astype(jnp.float32)
    be2 = beta.reshape(C, 1).astype(jnp.float32)
    mask_p = jnp.pad(mask, ((0, 0), (0, 0), (0, t_round - T))).astype(jnp.float32)
    args += [b2, g2, be2, mask_p]
    in_specs += [
        pl.BlockSpec((C, 1), lambda b, t: (0, 0)),
        pl.BlockSpec((C, 1), lambda b, t: (0, 0)),
        pl.BlockSpec((C, 1), lambda b, t: (0, 0)),
        pl.BlockSpec((1, 1, tile_t), lambda b, t: (b, 0, t)),
    ]

    kernel = _make_kernel(C, tile_t, K, use_im2col)

    # VMEM limit from the per-step working set (with headroom), kept inside
    # physical VMEM (64 MiB on v7x).
    out_itemsize = jnp.dtype(x.dtype).itemsize
    est = (2 * (C * tile_t + C * max(K - 1, 1)) * mxu_itemsize   # x + halo (dbl buf)
           + 2 * C * tile_t * out_itemsize                       # out (dbl buf)
           + w_arg.size * mxu_itemsize
           + 2 * tile_t * 4                                      # mask (dbl buf)
           + (K * C * tile_t * mxu_itemsize if use_im2col
              else C * tile_t * mxu_itemsize)                    # im2col / window
           + C * (tile_t + K) * mxu_itemsize                     # stitched window
           + 4 * C * tile_t * 4)                                 # f32 temporaries
    vmem_limit = int(min(int(vmem_cap * 0.9), max(16 * 1024 * 1024, 2 * est)))

    out = pl.pallas_call(
        kernel,
        out_shape=jax.ShapeDtypeStruct((B, C, t_round), x.dtype),
        grid=(B, n_t),
        in_specs=in_specs,
        out_specs=pl.BlockSpec((1, C, tile_t), lambda b, t: (b, 0, t)),
        compiler_params=pltpu.CompilerParams(
            dimension_semantics=("parallel", "parallel"),
            vmem_limit_bytes=vmem_limit,
        ),
    )(*args)

    return out if t_round == T else out[:, :, :T]


def basic_layer_ref(x, mask, weight, bias, gamma, beta):
    """Pure-JAX reference of the PyTorch forward (eval mode)."""
    K = weight.shape[-1]
    pad = K // 2
    conv = jax.lax.conv_general_dilated(
        x, weight, window_strides=(1,), padding=[(pad, pad)],
        dimension_numbers=("NCH", "OIH", "NCH"),
        precision=jax.lax.Precision.HIGHEST,
    ) + bias[None, :, None]
    act = jnp.maximum(conv, 0.0)
    mean = jnp.mean(act, axis=1, keepdims=True)
    var = jnp.mean((act - mean) ** 2, axis=1, keepdims=True)
    y = (act - mean) / jnp.sqrt(var + LN_EPS)
    y = y * gamma[None, :, None] + beta[None, :, None]
    return y * mask


def _make_inputs(key, B, C, T, K):
    ks = jax.random.split(key, 6)
    x = jax.random.normal(ks[0], (B, C, T), dtype=jnp.float32)
    weight = jax.random.normal(ks[1], (C, C, K), dtype=jnp.float32) / (C * K) ** 0.5
    bias = 0.1 * jax.random.normal(ks[2], (C,), dtype=jnp.float32)
    gamma = 1.0 + 0.1 * jax.random.normal(ks[3], (C,), dtype=jnp.float32)
    beta = 0.1 * jax.random.normal(ks[4], (C,), dtype=jnp.float32)
    mask = (jax.random.uniform(ks[5], (B, 1, T)) > 0.2).astype(jnp.float32)
    return x, mask, weight, bias, gamma, beta


if __name__ == "__main__":
    key = jax.random.PRNGKey(0)
    k1, k2 = jax.random.split(key)

    # (B, C, T, K, tile_t, mxu_dtype, tol, key): exercises the small-C im2col
    # path (f32 and bf16 MXU inputs, 2 time tiles + halo) and the C>=128
    # K-accumulated-matmul path.
    cases = [
        (2, 32, 256, 5, 128, jnp.float32, 5e-3, k1),
        (2, 32, 256, 5, 128, jnp.bfloat16, 2e-2, k1),
        (2, 128, 256, 3, 128, jnp.float32, 5e-3, k2),
    ]
    for B, C, T, K, tile_t, mxu_dtype, tol, kk in cases:
        x, mask, weight, bias, gamma, beta = _make_inputs(kk, B, C, T, K)
        out = basic_layer(x, mask, weight, bias, gamma, beta,
                          tile_t=tile_t, mxu_dtype=mxu_dtype)
        out = jax.block_until_ready(out)
        assert out.shape == (B, C, T)
        # Compare against the reference evaluated at the precision fed to MXU.
        xq = x.astype(mxu_dtype).astype(jnp.float32)
        wq = weight.astype(mxu_dtype).astype(jnp.float32)
        ref = basic_layer_ref(xq, mask, wq, bias, gamma, beta)
        assert bool(jnp.allclose(out, ref, atol=tol, rtol=tol)), (
            f"mismatch vs reference (C={C}, K={K}, mxu_dtype={mxu_dtype})")

    print("KERNEL_OK")
</pallas_src>

<mosaic_0001>
module attributes {stable_mosaic.version = 11 : i64} {
  func.func @kernel(%arg0: i32, %arg1: i32, %arg2: memref<1x32x128xf32, #tpu.memory_space<vmem>>, %arg3: memref<1x1x32x4xf32, #tpu.memory_space<vmem>>, %arg4: memref<32x160xf32, #tpu.memory_space<vmem>>, %arg5: memref<32x1xf32, #tpu.memory_space<vmem>>, %arg6: memref<32x1xf32, #tpu.memory_space<vmem>>, %arg7: memref<32x1xf32, #tpu.memory_space<vmem>>, %arg8: memref<1x1x128xf32, #tpu.memory_space<vmem>>, %arg9: memref<1x32x128xf32, #tpu.memory_space<vmem>>) attributes {dimension_semantics = [#tpu.dimension_semantics<parallel>, #tpu.dimension_semantics<parallel>], iteration_bounds = array<i64: 2, 2>, scalar_prefetch = 0 : i64, scratch_operands = 0 : i64, tpu.core_type = #tpu.core_type<tc>, window_params = [{transform_indices = @transform_0, window_bounds = array<i64: 1, 32, 128>}, {transform_indices = @transform_1, window_bounds = array<i64: 1, 1, 32, 4>}, {pipeline_mode = #tpu.pipeline_mode<synchronous>, transform_indices = @transform_2, window_bounds = array<i64: 32, 160>}, {pipeline_mode = #tpu.pipeline_mode<synchronous>, transform_indices = @transform_3, window_bounds = array<i64: 32, 1>}, {pipeline_mode = #tpu.pipeline_mode<synchronous>, transform_indices = @transform_4, window_bounds = array<i64: 32, 1>}, {pipeline_mode = #tpu.pipeline_mode<synchronous>, transform_indices = @transform_5, window_bounds = array<i64: 32, 1>}, {transform_indices = @transform_6, window_bounds = array<i64: 1, 1, 128>}, {transform_indices = @transform_7, window_bounds = array<i64: 1, 32, 128>}]} {
    %c0 = arith.constant 0 : index
    %c0_0 = arith.constant 0 : index
    %c0_1 = arith.constant 0 : index
    %0 = vector.load %arg2[%c0, %c0_0, %c0_1] : memref<1x32x128xf32, #tpu.memory_space<vmem>>, vector<1x32x128xf32>
    %1 = vector.shape_cast %0 : vector<1x32x128xf32> to vector<32x128xf32>
    %c0_2 = arith.constant 0 : index
    %c0_3 = arith.constant 0 : index
    %c0_4 = arith.constant 0 : index
    %c0_5 = arith.constant 0 : index
    %2 = vector.load %arg3[%c0_2, %c0_3, %c0_4, %c0_5] : memref<1x1x32x4xf32, #tpu.memory_space<vmem>>, vector<1x1x32x4xf32>
    %3 = vector.shape_cast %2 : vector<1x1x32x4xf32> to vector<32x4xf32>
    %c0_6 = arith.constant 0 : index
    %c0_7 = arith.constant 0 : index
    %c0_8 = arith.constant 0 : index
    %4 = vector.load %arg8[%c0_6, %c0_7, %c0_8] : memref<1x1x128xf32, #tpu.memory_space<vmem>>, vector<1x1x128xf32>
    %5 = vector.shape_cast %4 : vector<1x1x128xf32> to vector<1x128xf32>
    %6 = tpu.concatenate %1, %3 in 1 : vector<32x128xf32>, vector<32x4xf32> -> vector<32x132xf32>
    %7 = vector.extract_strided_slice %6 {offsets = [0, 0], sizes = [32, 128], strides = [1, 1]} : vector<32x132xf32> to vector<32x128xf32>
    %8 = vector.extract_strided_slice %6 {offsets = [0, 1], sizes = [32, 128], strides = [1, 1]} : vector<32x132xf32> to vector<32x128xf32>
    %9 = vector.extract_strided_slice %6 {offsets = [0, 2], sizes = [32, 128], strides = [1, 1]} : vector<32x132xf32> to vector<32x128xf32>
    %10 = vector.extract_strided_slice %6 {offsets = [0, 3], sizes = [32, 128], strides = [1, 1]} : vector<32x132xf32> to vector<32x128xf32>
    %11 = vector.extract_strided_slice %6 {offsets = [0, 4], sizes = [32, 128], strides = [1, 1]} : vector<32x132xf32> to vector<32x128xf32>
    %12 = tpu.concatenate %7, %8, %9, %10, %11 in 0 : vector<32x128xf32>, vector<32x128xf32>, vector<32x128xf32>, vector<32x128xf32>, vector<32x128xf32> -> vector<160x128xf32>
    %c0_9 = arith.constant 0 : index
    %c0_10 = arith.constant 0 : index
    %13 = vector.load %arg4[%c0_9, %c0_10] : memref<32x160xf32, #tpu.memory_space<vmem>>, vector<32x160xf32>
    %cst = arith.constant dense<0.000000e+00> : vector<32x128xf32>
    %14 = tpu.matmul %13, %12, %cst {dimension_numbers = #tpu.dot_dimension_numbers<[1], [0], [0], [1], [0, 0, 1, 1], [], []>} : vector<32x160xf32>, vector<160x128xf32>, vector<32x128xf32> -> vector<32x128xf32>
    %c0_11 = arith.constant 0 : index
    %c0_12 = arith.constant 0 : index
    %15 = vector.load %arg5[%c0_11, %c0_12] : memref<32x1xf32, #tpu.memory_space<vmem>>, vector<32x1xf32>
    %16 = vector.broadcast %15 : vector<32x1xf32> to vector<32x128xf32>
    %17 = arith.addf %14, %16 : vector<32x128xf32>
    %cst_13 = arith.constant 0.000000e+00 : f32
    %18 = vector.broadcast %cst_13 : f32 to vector<32x128xf32>
    %19 = arith.maximumf %17, %18 : vector<32x128xf32>
    %cst_14 = arith.constant dense<0.000000e+00> : vector<128xf32>
    %20 = vector.multi_reduction <add>, %19, %cst_14 [0] : vector<32x128xf32> to vector<128xf32>
    %21 = vector.shape_cast %20 : vector<128xf32> to vector<1x128xf32>
    %cst_15 = arith.constant 3.125000e-02 : f32
    %22 = vector.broadcast %cst_15 : f32 to vector<1x128xf32>
    %23 = arith.mulf %21, %22 : vector<1x128xf32>
    %24 = vector.broadcast %23 : vector<1x128xf32> to vector<32x128xf32>
    %25 = arith.subf %19, %24 : vector<32x128xf32>
    %26 = arith.mulf %25, %25 : vector<32x128xf32>
    %cst_16 = arith.constant dense<0.000000e+00> : vector<128xf32>
    %27 = vector.multi_reduction <add>, %26, %cst_16 [0] : vector<32x128xf32> to vector<128xf32>
    %28 = vector.shape_cast %27 : vector<128xf32> to vector<1x128xf32>
    %cst_17 = arith.constant 3.125000e-02 : f32
    %29 = vector.broadcast %cst_17 : f32 to vector<1x128xf32>
    %30 = arith.mulf %28, %29 : vector<1x128xf32>
    %cst_18 = arith.constant 9.99999974E-6 : f32
    %31 = vector.broadcast %cst_18 : f32 to vector<1x128xf32>
    %32 = arith.addf %30, %31 : vector<1x128xf32>
    %33 = math.rsqrt %32 : vector<1x128xf32>
    %34 = vector.broadcast %33 : vector<1x128xf32> to vector<32x128xf32>
    %35 = arith.mulf %25, %34 : vector<32x128xf32>
    %c0_19 = arith.constant 0 : index
    %c0_20 = arith.constant 0 : index
    %36 = vector.load %arg6[%c0_19, %c0_20] : memref<32x1xf32, #tpu.memory_space<vmem>>, vector<32x1xf32>
    %37 = vector.broadcast %36 : vector<32x1xf32> to vector<32x128xf32>
    %38 = arith.mulf %35, %37 : vector<32x128xf32>
    %c0_21 = arith.constant 0 : index
    %c0_22 = arith.constant 0 : index
    %39 = vector.load %arg7[%c0_21, %c0_22] : memref<32x1xf32, #tpu.memory_space<vmem>>, vector<32x1xf32>
    %40 = vector.broadcast %39 : vector<32x1xf32> to vector<32x128xf32>
    %41 = arith.addf %38, %40 : vector<32x128xf32>
    %42 = vector.broadcast %5 : vector<1x128xf32> to vector<32x128xf32>
    %43 = arith.mulf %41, %42 : vector<32x128xf32>
    %c0_23 = arith.constant 0 : index
    %c0_24 = arith.constant 0 : index
    %c0_25 = arith.constant 0 : index
    %44 = vector.load %arg9[%c0_23, %c0_24, %c0_25] : memref<1x32x128xf32, #tpu.memory_space<vmem>>, vector<1x32x128xf32>
    %45 = vector.shape_cast %44 : vector<1x32x128xf32> to vector<32x128xf32>
    %46 = vector.shape_cast %43 : vector<32x128xf32> to vector<1x32x128xf32>
    tpu.vector_store %arg9[%c0_23, %c0_24, %c0_25], %46 {strides = array<i32>} : memref<1x32x128xf32, #tpu.memory_space<vmem>>, vector<1x32x128xf32>,
    return
  }
  func.func @transform_0(%arg0: i32, %arg1: i32) -> (i32, i32, i32) {
    %c0_i32 = arith.constant 0 : i32
    %c0_i32_0 = arith.constant 0 : i32
    return %arg0, %c0_i32, %arg1 : i32, i32, i32
  }
  func.func @transform_1(%arg0: i32, %arg1: i32) -> (i32, i32, i32, i32) {
    %c0_i32 = arith.constant 0 : i32
    %c0_i32_0 = arith.constant 0 : i32
    %c0_i32_1 = arith.constant 0 : i32
    return %arg0, %arg1, %c0_i32, %c0_i32_0 : i32, i32, i32, i32
  }
  func.func @transform_2(%arg0: i32, %arg1: i32) -> (i32, i32) {
    %c0_i32 = arith.constant 0 : i32
    %c0_i32_0 = arith.constant 0 : i32
    %c0_i32_1 = arith.constant 0 : i32
    return %c0_i32, %c0_i32_0 : i32, i32
  }
  func.func @transform_3(%arg0: i32, %arg1: i32) -> (i32, i32) {
    %c0_i32 = arith.constant 0 : i32
    %c0_i32_0 = arith.constant 0 : i32
    %c0_i32_1 = arith.constant 0 : i32
    return %c0_i32, %c0_i32_0 : i32, i32
  }
  func.func @transform_4(%arg0: i32, %arg1: i32) -> (i32, i32) {
    %c0_i32 = arith.constant 0 : i32
    %c0_i32_0 = arith.constant 0 : i32
    %c0_i32_1 = arith.constant 0 : i32
    return %c0_i32, %c0_i32_0 : i32, i32
  }
  func.func @transform_5(%arg0: i32, %arg1: i32) -> (i32, i32) {
    %c0_i32 = arith.constant 0 : i32
    %c0_i32_0 = arith.constant 0 : i32
    %c0_i32_1 = arith.constant 0 : i32
    return %c0_i32, %c0_i32_0 : i32, i32
  }
  func.func @transform_6(%arg0: i32, %arg1: i32) -> (i32, i32, i32) {
    %c0_i32 = arith.constant 0 : i32
    %c0_i32_0 = arith.constant 0 : i32
    return %arg0, %c0_i32, %arg1 : i32, i32, i32
  }
  func.func @transform_7(%arg0: i32, %arg1: i32) -> (i32, i32, i32) {
    %c0_i32 = arith.constant 0 : i32
    %c0_i32_0 = arith.constant 0 : i32
    return %arg0, %c0_i32, %arg1 : i32, i32, i32
  }
}

</mosaic_0001>

<llo_original>
// kernel: tpu_custom_call.1
$region0: #{tpu_custom_call.1}
  #allocation0 [shape = 'u32[]', space=smem, size = 0x4, offset = 0x4, fixed_abs, tag = 'smem constant byte address 0x4 - core index']
  #allocation1 [shape = 'u32[144,128]{1,0:T(1,128)}', space=vmem, size = 0x12000, scoped, tag = 'internal scratch']
  %s0 = inlined_call_operand.vmem [shape: f32[2,32,256], index: 0, kind: input, shape index: {}]
  %s1 = inlined_call_operand.vmem [shape: f32[2,2,32,4], index: 1, kind: input, shape index: {}]
  %s2 = inlined_call_operand.vmem [shape: f32[32,160], index: 2, kind: input, shape index: {}]
  %s3 = inlined_call_operand.vmem [shape: f32[32,1], index: 3, kind: input, shape index: {}]
  %s4 = inlined_call_operand.vmem [shape: f32[32,1], index: 4, kind: input, shape index: {}]
  %s5 = inlined_call_operand.vmem [shape: f32[32,1], index: 5, kind: input, shape index: {}]
  %s6 = inlined_call_operand.vmem [shape: f32[2,1,256], index: 6, kind: input, shape index: {}]
  %s7 = inlined_call_operand.hbm [shape: f32[2,32,256], index: 7, kind: output, shape index: {}]
  %s8 = sld [smem:[#allocation0]]
  $region99: #{tpu_custom_call.1} parent=0
    _
  %s10 = ssub.s32 1, %s8
  %s11 = scalar_select 0, %s10, %s8
  $region1: #{tpu_custom_call.1} parent=0
    #allocation2 [shape = 'u8[32768]{0}', space=vmem, size = 0x8000, scoped, tag = 'input window, operand 0']
    #allocation3 [shape = 'u8[32768]{0}', space=vmem, size = 0x8000, scoped, tag = 'output window, operand 0']
    #allocation4 [shape = 's32[2]{0}', space=sflag, size = 0x8, scoped, tag = 'scoped memory for tpu_custom_call.1']
    %12 = vsyncpa [#allocation4], 0
    %s13 = scalar_lea.sflag [#allocation4], 1
    %14 = vsyncpa %s13, 0
    loop: start=0, step=1, limit=6
    $region2: #{tpu_custom_call.1} parent=1 // loop_pre_header
      _
    $region3: #{tpu_custom_call.1} parent=1 // loop_header
      %s16 = sphi 0, %s20
      %p17 = scmp.ge.s32.totalorder %s16, 6
      %s23 = sphi 0, %s35
      %s24 = sphi 0, %s31
      %s25 = sphi 0, %s23
      %s26 = sphi 0, %s24
      %s27 = sphi 0, %s25
      %s28 = sphi 0, %s26
      %s40 = sphi 0, %s42
      %s43 = sphi 0, %s40
      %s44 = sphi 0, %s43
      %s60 = sphi 0, %s44
      %s68 = sphi 0, %s70
      %s71 = sphi 0, %s68
      %s72 = sphi 0, %s71
      %s88 = sphi 0, %s72
      %s92 = sphi 0, %s92
      %s94 = sphi 0, %s92
      %s95 = sphi 0, %s94
      %s109 = sphi 0, %s95
      %s113 = sphi 0, %s113
      %s115 = sphi 0, %s113
      %s116 = sphi 0, %s115
      %s130 = sphi 0, %s116
      %s134 = sphi 0, %s134
      %s136 = sphi 0, %s134
      %s137 = sphi 0, %s136
      %s151 = sphi 0, %s137
      %s155 = sphi 0, %s155
      %s157 = sphi 0, %s155
      %s158 = sphi 0, %s157
      %s172 = sphi 0, %s158
      %s180 = sphi 0, %s182
      %s183 = sphi 0, %s180
      %s184 = sphi 0, %s183
      %s200 = sphi 0, %s184
      %s208 = sphi 0, %s210
      %s211 = sphi 0, %s208
      %s212 = sphi 0, %s211
      %s228 = sphi 0, %s212
    $region4: #{tpu_custom_call.1} parent=1 // loop_header_branch
      %19 = sbr.rel (%p17) target = $region8
    $region5: #{tpu_custom_call.1} parent=1 // loop_body
      %s21 = ssub.s32 %s16, 1
      %s22 = ssub.s32 %s16, 2
      %s29 = sadd.s32 1, %s24
      %p30 = scmp.ge.s32.totalorder %s29, 2
      %s31 = scalar_select %p30, 0, %s29
      %s32 = sadd.s32 1, %s23
      %s33 = scalar_select %p30, %s32, %s23
      %p34 = scmp.ge.s32.totalorder %s33, 2
      %s35 = scalar_select %p34, 0, %s33
      %s36 = ssub.s32 %s23, %s35
      %s37 = ssub.s32 %s24, %s31
      %s38 = sor.u32 %s36, %s37
      %p39 = scmp.eq.s32.totalorder %s38, 0
      %s41 = sadd.s32 %s40, 1
      %s42 = scalar_select %p39, %s40, %s41
      %p45 = pneg %p39
      %p46 = scmp.eq.s32.totalorder %s16, 3
      %p47 = por %p45, %p46
      %p48 = scmp.ne.s32.totalorder %s40, %s43
      %p49 = scmp.eq.s32.totalorder %s16, 0
      %p50 = por %p48, %p49
      %p51 = scmp.ne.s32.totalorder %s40, %s43
      %p52 = scmp.eq.s32.totalorder %s21, 3
      %p53 = por %p51, %p52
      %p54 = scmp.ne.s32.totalorder %s43, %s44
      %p55 = scmp.eq.s32.totalorder %s21, 0
      %p56 = por %p54, %p55
      %p57 = scmp.ne.s32.totalorder %s43, %s44
      %p58 = scmp.eq.s32.totalorder %s22, 3
      %p59 = por %p57, %p58
      %p61 = scmp.ne.s32.totalorder %s44, %s60
      %p62 = scmp.eq.s32.totalorder %s22, 0
      %p63 = por %p61, %p62
      %s64 = ssub.s32 %s23, %s35
      %s65 = ssub.s32 %s24, %s31
      %s66 = sor.u32 %s64, %s65
      %p67 = scmp.eq.s32.totalorder %s66, 0
      %s69 = sadd.s32 %s68, 1
      %s70 = scalar_select %p67, %s68, %s69
      %p73 = pneg %p67
      %p74 = scmp.eq.s32.totalorder %s16, 3
      %p75 = por %p73, %p74
      %p76 = scmp.ne.s32.totalorder %s68, %s71
      %p77 = scmp.eq.s32.totalorder %s16, 0
      %p78 = por %p76, %p77
      %p79 = scmp.ne.s32.totalorder %s68, %s71
      %p80 = scmp.eq.s32.totalorder %s21, 3
      %p81 = por %p79, %p80
      %p82 = scmp.ne.s32.totalorder %s71, %s72
      %p83 = scmp.eq.s32.totalorder %s21, 0
      %p84 = por %p82, %p83
      %p85 = scmp.ne.s32.totalorder %s71, %s72
      %p86 = scmp.eq.s32.totalorder %s22, 3
      %p87 = por %p85, %p86
      %p89 = scmp.ne.s32.totalorder %s72, %s88
      %p90 = scmp.eq.s32.totalorder %s22, 0
      %p91 = por %p89, %p90
      %s93 = sadd.s32 %s92, 1
      %p96 = scmp.eq.s32.totalorder %s16, 3
      %p97 = scmp.ne.s32.totalorder %s92, %s94
      %p98 = scmp.eq.s32.totalorder %s16, 0
      %p99 = por %p97, %p98
      %p100 = scmp.ne.s32.totalorder %s92, %s94
      %p101 = scmp.eq.s32.totalorder %s21, 3
      %p102 = por %p100, %p101
      %p103 = scmp.ne.s32.totalorder %s94, %s95
      %p104 = scmp.eq.s32.totalorder %s21, 0
      %p105 = por %p103, %p104
      %p106 = scmp.ne.s32.totalorder %s94, %s95
      %p107 = scmp.eq.s32.totalorder %s22, 3
      %p108 = por %p106, %p107
      %p110 = scmp.ne.s32.totalorder %s95, %s109
      %p111 = scmp.eq.s32.totalorder %s22, 0
      %p112 = por %p110, %p111
      %s114 = sadd.s32 %s113, 1
      %p117 = scmp.eq.s32.totalorder %s16, 3
      %p118 = scmp.ne.s32.totalorder %s113, %s115
      %p119 = scmp.eq.s32.totalorder %s16, 0
      %p120 = por %p118, %p119
      %p121 = scmp.ne.s32.totalorder %s113, %s115
      %p122 = scmp.eq.s32.totalorder %s21, 3
      %p123 = por %p121, %p122
      %p124 = scmp.ne.s32.totalorder %s115, %s116
      %p125 = scmp.eq.s32.totalorder %s21, 0
      %p126 = por %p124, %p125
      %p127 = scmp.ne.s32.totalorder %s115, %s116
      %p128 = scmp.eq.s32.totalorder %s22, 3
      %p129 = por %p127, %p128
      %p131 = scmp.ne.s32.totalorder %s116, %s130
      %p132 = scmp.eq.s32.totalorder %s22, 0
      %p133 = por %p131, %p132
      %s135 = sadd.s32 %s134, 1
      %p138 = scmp.eq.s32.totalorder %s16, 3
      %p139 = scmp.ne.s32.totalorder %s134, %s136
      %p140 = scmp.eq.s32.totalorder %s16, 0
      %p141 = por %p139, %p140
      %p142 = scmp.ne.s32.totalorder %s134, %s136
      %p143 = scmp.eq.s32.totalorder %s21, 3
      %p144 = por %p142, %p143
      %p145 = scmp.ne.s32.totalorder %s136, %s137
      %p146 = scmp.eq.s32.totalorder %s21, 0
      %p147 = por %p145, %p146
      %p148 = scmp.ne.s32.totalorder %s136, %s137
      %p149 = scmp.eq.s32.totalorder %s22, 3
      %p150 = por %p148, %p149
      %p152 = scmp.ne.s32.totalorder %s137, %s151
      %p153 = scmp.eq.s32.totalorder %s22, 0
      %p154 = por %p152, %p153
      %s156 = sadd.s32 %s155, 1
      %p159 = scmp.eq.s32.totalorder %s16, 3
      %p160 = scmp.ne.s32.totalorder %s155, %s157
      %p161 = scmp.eq.s32.totalorder %s16, 0
      %p162 = por %p160, %p161
      %p163 = scmp.ne.s32.totalorder %s155, %s157
      %p164 = scmp.eq.s32.totalorder %s21, 3
      %p165 = por %p163, %p164
      %p166 = scmp.ne.s32.totalorder %s157, %s158
      %p167 = scmp.eq.s32.totalorder %s21, 0
      %p168 = por %p166, %p167
      %p169 = scmp.ne.s32.totalorder %s157, %s158
      %p170 = scmp.eq.s32.totalorder %s22, 3
      %p171 = por %p169, %p170
      %p173 = scmp.ne.s32.totalorder %s158, %s172
      %p174 = scmp.eq.s32.totalorder %s22, 0
      %p175 = por %p173, %p174
      %s176 = ssub.s32 %s23, %s35
      %s177 = ssub.s32 %s24, %s31
      %s178 = sor.u32 %s176, %s177
      %p179 = scmp.eq.s32.totalorder %s178, 0
      %s181 = sadd.s32 %s180, 1
      %s182 = scalar_select %p179, %s180, %s181
      %p185 = pneg %p179
      %p186 = scmp.eq.s32.totalorder %s16, 3
      %p187 = por %p185, %p186
      %p188 = scmp.ne.s32.totalorder %s180, %s183
      %p189 = scmp.eq.s32.totalorder %s16, 0
      %p190 = por %p188, %p189
      %p191 = scmp.ne.s32.totalorder %s180, %s183
      %p192 = scmp.eq.s32.totalorder %s21, 3
      %p193 = por %p191, %p192
      %p194 = scmp.ne.s32.totalorder %s183, %s184
      %p195 = scmp.eq.s32.totalorder %s21, 0
      %p196 = por %p194, %p195
      %p197 = scmp.ne.s32.totalorder %s183, %s184
      %p198 = scmp.eq.s32.totalorder %s22, 3
      %p199 = por %p197, %p198
      %p201 = scmp.ne.s32.totalorder %s184, %s200
      %p202 = scmp.eq.s32.totalorder %s22, 0
      %p203 = por %p201, %p202
      %s204 = ssub.s32 %s23, %s35
      %s205 = ssub.s32 %s24, %s31
      %s206 = sor.u32 %s204, %s205
      %p207 = scmp.eq.s32.totalorder %s206, 0
      %s209 = sadd.s32 %s208, 1
      %s210 = scalar_select %p207, %s208, %s209
      %p213 = pneg %p207
      %p214 = scmp.eq.s32.totalorder %s16, 3
      %p215 = por %p213, %p214
      %p216 = scmp.ne.s32.totalorder %s208, %s211
      %p217 = scmp.eq.s32.totalorder %s16, 0
      %p218 = por %p216, %p217
      %p219 = scmp.ne.s32.totalorder %s208, %s211
      %p220 = scmp.eq.s32.totalorder %s21, 3
      %p221 = por %p219, %p220
      %p222 = scmp.ne.s32.totalorder %s211, %s212
      %p223 = scmp.eq.s32.totalorder %s21, 0
      %p224 = por %p222, %p223
      %p225 = scmp.ne.s32.totalorder %s211, %s212
      %p226 = scmp.eq.s32.totalorder %s22, 3
      %p227 = por %p225, %p226
      %p229 = scmp.ne.s32.totalorder %s212, %s228
      %p230 = scmp.eq.s32.totalorder %s22, 0
      %p231 = por %p229, %p230
      %p232 = scmp.le.s32.totalorder 1, %s16
      %p233 = scmp.lt.s32.totalorder %s16, 5
      %p234 = pnand %p232, %p233
      %p235 = pneg %p234
      // Predicated region
      $region9: #{tpu_custom_call.1} parent=5 // pred_check
        _
      $region10: #{tpu_custom_call.1} parent=5 // pred_check_branch
        %237 = sbr.rel (%p234) target = $region12
      $region11: #{tpu_custom_call.1} parent=5 // pred_region
        %s238 = ssub.s32 %s16, 1
        // Predicated region
        $region13: #{tpu_custom_call.1} parent=11 // pred_check
          %p239 = pneg %p105
        $region14: #{tpu_custom_call.1} parent=11 // pred_check_branch
          %241 = sbr.rel (%p239) target = $region16
        $region15: #{tpu_custom_call.1} parent=11 // pred_region
          _
        $region16: #{tpu_custom_call.1} parent=11 // pred_fallthru
          _
        // Predicated region
        $region17: #{tpu_custom_call.1} parent=11 // pred_check
          %p242 = pneg %p126
        $region18: #{tpu_custom_call.1} parent=11 // pred_check_branch
          %244 = sbr.rel (%p242) target = $region20
        $region19: #{tpu_custom_call.1} parent=11 // pred_region
          _
        $region20: #{tpu_custom_call.1} parent=11 // pred_fallthru
          _
        // Predicated region
        $region21: #{tpu_custom_call.1} parent=11 // pred_check
          %p245 = pneg %p147
        $region22: #{tpu_custom_call.1} parent=11 // pred_check_branch
          %247 = sbr.rel (%p245) target = $region24
        $region23: #{tpu_custom_call.1} parent=11 // pred_region
          _
        $region24: #{tpu_custom_call.1} parent=11 // pred_fallthru
          _
        // Predicated region
        $region25: #{tpu_custom_call.1} parent=11 // pred_check
          %p248 = pneg %p168
        $region26: #{tpu_custom_call.1} parent=11 // pred_check_branch
          %250 = sbr.rel (%p248) target = $region28
        $region27: #{tpu_custom_call.1} parent=11 // pred_region
          _
        $region28: #{tpu_custom_call.1} parent=11 // pred_fallthru
          _
      $region12: #{tpu_custom_call.1} parent=5 // pred_fallthru
        _
      %p251 = scmp.lt.s32.totalorder %s16, 4
      // Predicated region
      $region29: #{tpu_custom_call.1} parent=5 // pred_check
        %p252 = pneg %p251
      $region30: #{tpu_custom_call.1} parent=5 // pred_check_branch
        %254 = sbr.rel (%p252) target = $region32
      $region31: #{tpu_custom_call.1} parent=5 // pred_region
        // Predicated region
        $region33: #{tpu_custom_call.1} parent=31 // pred_check
          %p255 = pneg %p50
        $region34: #{tpu_custom_call.1} parent=31 // pred_check_branch
          %257 = sbr.rel (%p255) target = $region36
        $region35: #{tpu_custom_call.1} parent=31 // pred_region
          %s258 = sand.u32 %s40, 1
          %s259 = sand.u32 %s40, 1
          %s260 = smul.addr %s259, 32
          %s261 = scalar_lea.vmem [#allocation2], %s260
          %s262 = smul.addr %s23, 8
          %s263 = sadd.s32 %s24, %s262
          %s264 = smul.addr %s263, 8
          %s265 = scalar_lea.vmem %s0, %s264
          // Predicated region
          $region37: #{tpu_custom_call.1} parent=35 // pred_check
            _
          $region38: #{tpu_custom_call.1} parent=35 // pred_check_branch
            %267 = sbr.rel (0) target = $region40
          $region39: #{tpu_custom_call.1} parent=35 // pred_region
            // Predicated region
            $region41: #{tpu_custom_call.1} parent=39 // pred_check
              _
            $region42: #{tpu_custom_call.1} parent=39 // pred_check_branch
              %269 = sbr.rel (0) target = $region44
            $region43: #{tpu_custom_call.1} parent=39 // pred_region
              // Predicated region
              $region56: #{tpu_custom_call.1} parent=43 // pred_check
                _
              $region57: #{tpu_custom_call.1} parent=43 // pred_check_branch
                %291 = sbr.rel (0) target = $region59
              $region58: #{tpu_custom_call.1} parent=43 // pred_region
                loop: start=0, step=1, limit=1
                $region60: #{tpu_custom_call.1} parent=58 // loop_pre_header
                  _
                $region61: #{tpu_custom_call.1} parent=58 // loop_header
                  %s293 = sphi 0, %s297
                  %p294 = scmp.ge.s32.totalorder %s293, 1
                  %s298 = sphi %s265, %s265
                  %s299 = sphi %s261, %s261
                $region62: #{tpu_custom_call.1} parent=58 // loop_header_branch
                  %296 = sbr.rel (%p294) target = $region66
                $region63: #{tpu_custom_call.1} parent=58 // loop_body
                  %v300 = vld [vmem:[%s298] sm:$0xff]
                  %301 = vst [vmem:[%s299] sm:$0xff] %v300
                  %v302 = vld [vmem:[%s298 + $0x10] sm:$0xff]
                  %303 = vst [vmem:[%s299 + $0x8] sm:$0xff] %v302
                  %v304 = vld [vmem:[%s298 + $0x20] sm:$0xff]
                  %305 = vst [vmem:[%s299 + $0x10] sm:$0xff] %v304
                  %v306 = vld [vmem:[%s298 + $0x30] sm:$0xff]
                  %307 = vst [vmem:[%s299 + $0x18] sm:$0xff] %v306
                $region64: #{tpu_custom_call.1} parent=58 // loop_footer
                  %s297 = sadd.s32 1, %s293
                $region65: #{tpu_custom_call.1} parent=58 // loop_footer_branch
                  %292 = sbr.rel target = $region61
                $region66: #{tpu_custom_call.1} parent=58 // loop_exit
                  _
              $region59: #{tpu_custom_call.1} parent=43 // pred_fallthru
                _
              // Predicated region
              $region67: #{tpu_custom_call.1} parent=43 // pred_check
                _
              $region68: #{tpu_custom_call.1} parent=43 // pred_check_branch
                %309 = sbr.rel target = $region70
              $region69: #{tpu_custom_call.1} parent=43 // pred_region
                _
              $region70: #{tpu_custom_call.1} parent=43 // pred_fallthru
                _
            $region44: #{tpu_custom_call.1} parent=39 // pred_fallthru
              _
            // Predicated region
            $region45: #{tpu_custom_call.1} parent=39 // pred_check
              _
            $region46: #{tpu_custom_call.1} parent=39 // pred_check_branch
              %271 = sbr.rel target = $region48
            $region47: #{tpu_custom_call.1} parent=39 // pred_region
              %s273 = ssub.s32 256, 1
              loop: start=0, step=1, limit=1
              $region49: #{tpu_custom_call.1} parent=47 // loop_pre_header
                _
              $region50: #{tpu_custom_call.1} parent=47 // loop_header
                %s275 = sphi 0, %s279
                %p276 = scmp.ge.s32.totalorder %s275, 1
                %s280 = sphi %s265, %s265
                %s281 = sphi %s261, %s261
              $region51: #{tpu_custom_call.1} parent=47 // loop_header_branch
                %278 = sbr.rel (%p276) target = $region55
              $region52: #{tpu_custom_call.1} parent=47 // loop_body
                %v282 = vld [vmem:[%s280] sm:%s273]
                %283 = vst [vmem:[%s281] sm:%s273] %v282
                %v284 = vld [vmem:[%s280 + $0x10] sm:%s273]
                %285 = vst [vmem:[%s281 + $0x8] sm:%s273] %v284
                %v286 = vld [vmem:[%s280 + $0x20] sm:%s273]
                %287 = vst [vmem:[%s281 + $0x10] sm:%s273] %v286
                %v288 = vld [vmem:[%s280 + $0x30] sm:%s273]
                %289 = vst [vmem:[%s281 + $0x18] sm:%s273] %v288
              $region53: #{tpu_custom_call.1} parent=47 // loop_footer
                %s279 = sadd.s32 1, %s275
              $region54: #{tpu_custom_call.1} parent=47 // loop_footer_branch
                %274 = sbr.rel target = $region50
              $region55: #{tpu_custom_call.1} parent=47 // loop_exit
                _
            $region48: #{tpu_custom_call.1} parent=39 // pred_fallthru
              _
          $region40: #{tpu_custom_call.1} parent=35 // pred_fallthru
            _
          %310 = vnop
        $region36: #{tpu_custom_call.1} parent=31 // pred_fallthru
          _
        // Predicated region
        $region71: #{tpu_custom_call.1} parent=31 // pred_check
          %p311 = pneg %p78
        $region72: #{tpu_custom_call.1} parent=31 // pred_check_branch
          %313 = sbr.rel (%p311) target = $region74
        $region73: #{tpu_custom_call.1} parent=31 // pred_region
          %p314 = scmp.lt.s32.totalorder %s23, 1
          %s315 = scalar_select %p314, %s23, 1
          %p316 = scmp.lt.s32.totalorder %s24, 1
          %s317 = scalar_select %p316, %s24, 1
          %s318 = smul.addr %s317, 4
          %s319 = smul.addr %s315, 8
          %s320 = sadd.s32 %s318, %s319
          %s321 = smul.addr %s320, 8
          %s322 = scalar_lea.vmem %s1, %s321
        $region74: #{tpu_custom_call.1} parent=31 // pred_fallthru
          _
        // Predicated region
        $region75: #{tpu_custom_call.1} parent=31 // pred_check
          %p323 = pneg %p190
        $region76: #{tpu_custom_call.1} parent=31 // pred_check_branch
          %325 = sbr.rel (%p323) target = $region78
        $region77: #{tpu_custom_call.1} parent=31 // pred_region
          %p326 = scmp.lt.s32.totalorder %s23, 1
          %s327 = scalar_select %p326, %s23, 1
          %p328 = scmp.lt.s32.totalorder %s24, 1
          %s329 = scalar_select %p328, %s24, 1
          %s330 = smul.addr %s327, 2
          %s331 = sadd.s32 %s329, %s330
          %s332 = scalar_lea.vmem %s6, %s331
        $region78: #{tpu_custom_call.1} parent=31 // pred_fallthru
          _
      $region32: #{tpu_custom_call.1} parent=5 // pred_fallthru
        _
      %p333 = scmp.le.s32.totalorder 1, %s16
      %p334 = scmp.lt.s32.totalorder %s16, 5
      %p335 = pnand %p333, %p334
      %p336 = pneg %p335
      // Predicated region
      $region79: #{tpu_custom_call.1} parent=5 // pred_check
        _
      $region80: #{tpu_custom_call.1} parent=5 // pred_check_branch
        %338 = sbr.rel (%p335) target = $region82
      $region81: #{tpu_custom_call.1} parent=5 // pred_region
        %s339 = ssub.s32 %s16, 1
        %s340 = sand.u32 %s43, 1
        %s341 = sand.u32 %s43, 1
        %s342 = smul.addr %s341, 32
        %s343 = scalar_lea.vmem [#allocation2], %s342
        // Predicated region
        $region83: #{tpu_custom_call.1} parent=81 // pred_check
          %p344 = pneg %p56
        $region84: #{tpu_custom_call.1} parent=81 // pred_check_branch
          %346 = sbr.rel (%p344) target = $region86
        $region85: #{tpu_custom_call.1} parent=81 // pred_region
          _
        $region86: #{tpu_custom_call.1} parent=81 // pred_fallthru
          _
        %s347 = sand.u32 %s43, 1
        %s348 = sand.u32 %s43, 1
        %s349 = smul.addr %s348, 32
        %s350 = scalar_lea.vmem [#allocation2], %s349
        %p351 = pneg %p56
        %p352 = pneg %p53
        %p353 = scmp.lt.s32.totalorder %s25, 1
        %s354 = scalar_select %p353, %s25, 1
        %p355 = scmp.lt.s32.totalorder %s26, 1
        %s356 = scalar_select %p355, %s26, 1
        %s357 = smul.addr %s356, 4
        %s358 = smul.addr %s354, 8
        %s359 = sadd.s32 %s357, %s358
        %s360 = smul.addr %s359, 8
        %s361 = scalar_lea.vmem %s1, %s360
        %p362 = pneg %p84
        %p363 = pneg %p81
        %p364 = pneg %p105
        %p365 = pneg %p102
        %p366 = pneg %p126
        %p367 = pneg %p123
        %p368 = pneg %p147
        %p369 = pneg %p144
        %p370 = pneg %p168
        %p371 = pneg %p165
        %p372 = scmp.lt.s32.totalorder %s25, 1
        %s373 = scalar_select %p372, %s25, 1
        %p374 = scmp.lt.s32.totalorder %s26, 1
        %s375 = scalar_select %p374, %s26, 1
        %s376 = smul.addr %s373, 2
        %s377 = sadd.s32 %s375, %s376
        %s378 = scalar_lea.vmem %s6, %s377
        %p379 = pneg %p196
        %p380 = pneg %p193
        %p381 = pneg %p224
        %p382 = pneg %p221
        %s383 = sand.u32 %s211, 1
        %s384 = scalar_lea.sflag [#allocation4], %s383
        %s385 = sand.u32 %s211, 1
        %s386 = smul.addr %s385, 32
        %s387 = scalar_lea.vmem [#allocation3], %s386
        %p388 = scmp.lt.s32.totalorder %s25, 1
        %s389 = scalar_select %p388, %s25, 1
        %p390 = scmp.lt.s32.totalorder %s26, 1
        %s391 = scalar_select %p390, %s26, 1
        %s392 = smul.addr %s391, 4
        %s393 = smul.addr %s389, 8
        %s394 = sadd.s32 %s392, %s393
        %s395 = smul.addr %s394, 8
        %s396 = scalar_lea.vmem %s1, %s395
        %p397 = scmp.lt.s32.totalorder %s25, 1
        %s398 = scalar_select %p397, %s25, 1
        %p399 = scmp.lt.s32.totalorder %s26, 1
        %s400 = scalar_select %p399, %s26, 1
        %s401 = smul.addr %s398, 2
        %s402 = sadd.s32 %s400, %s401
        %s403 = scalar_lea.vmem %s6, %s402
        %v404 = vld [vmem:[%s343] sm:$0xff]
        %v405 = vld [vmem:[%s343 + $0x8] sm:$0xff]
        %v406 = vld [vmem:[%s343 + $0x10] sm:$0xff]
        %v407 = vld [vmem:[%s343 + $0x18] sm:$0xff]
        %v408 = vld [vmem:[%s396] sm:$0xff]
        %v409 = vld [vmem:[%s396 + $0x8] sm:$0xff]
        %v410 = vld [vmem:[%s396 + $0x10] sm:$0xff]
        %v411 = vld [vmem:[%s396 + $0x18] sm:$0xff]
        %v412 = vld [vmem:[%s403] sm:$0x1]
        %421 = vrot.lane.b32.xlu0 %v404, 127
        %v422 = vpop.permute.xlu0 %421
        %423 = vrot.lane.b32.xlu0 %v408, 127
        %v424 = vpop.permute.xlu0 %423
        %425 = vrot.lane.b32.xlu0 %v405, 127
        %v426 = vpop.permute.xlu0 %425
        %427 = vrot.lane.b32.xlu0 %v409, 127
        %v428 = vpop.permute.xlu0 %427
        %429 = vrot.lane.b32.xlu0 %v406, 127
        %v430 = vpop.permute.xlu0 %429
        %431 = vrot.lane.b32.xlu0 %v410, 127
        %v432 = vpop.permute.xlu0 %431
        %433 = vrot.lane.b32.xlu0 %v407, 127
        %v434 = vpop.permute.xlu0 %433
        %435 = vrot.lane.b32.xlu0 %v411, 127
        %v436 = vpop.permute.xlu0 %435
        %vm437 = vcmask 1039360
        %v438 = vsel %vm437, %v422, %v424
        %v439 = vsel %vm437, %v426, %v428
        %v440 = vsel %vm437, %v430, %v432
        %v441 = vsel %vm437, %v434, %v436
        %446 = vrot.lane.b32.xlu0 %v404, 126
        %v447 = vpop.permute.xlu0 %446
        %448 = vrot.lane.b32.xlu0 %v408, 126
        %v449 = vpop.permute.xlu0 %448
        %450 = vrot.lane.b32.xlu0 %v405, 126
        %v451 = vpop.permute.xlu0 %450
        %452 = vrot.lane.b32.xlu0 %v409, 126
        %v453 = vpop.permute.xlu0 %452
        %454 = vrot.lane.b32.xlu0 %v406, 126
        %v455 = vpop.permute.xlu0 %454
        %456 = vrot.lane.b32.xlu0 %v410, 126
        %v457 = vpop.permute.xlu0 %456
        %458 = vrot.lane.b32.xlu0 %v407, 126
        %v459 = vpop.permute.xlu0 %458
        %460 = vrot.lane.b32.xlu0 %v411, 126
        %v461 = vpop.permute.xlu0 %460
        %vm462 = vcmask 1031168
        %v463 = vsel %vm462, %v447, %v449
        %v464 = vsel %vm462, %v451, %v453
        %v465 = vsel %vm462, %v455, %v457
        %v466 = vsel %vm462, %v459, %v461
        %471 = vrot.lane.b32.xlu0 %v404, 125
        %v472 = vpop.permute.xlu0 %471
        %473 = vrot.lane.b32.xlu0 %v408, 125
        %v474 = vpop.permute.xlu0 %473
        %475 = vrot.lane.b32.xlu0 %v405, 125
        %v476 = vpop.permute.xlu0 %475
        %477 = vrot.lane.b32.xlu0 %v409, 125
        %v478 = vpop.permute.xlu0 %477
        %479 = vrot.lane.b32.xlu0 %v406, 125
        %v480 = vpop.permute.xlu0 %479
        %481 = vrot.lane.b32.xlu0 %v410, 125
        %v482 = vpop.permute.xlu0 %481
        %483 = vrot.lane.b32.xlu0 %v407, 125
        %v484 = vpop.permute.xlu0 %483
        %485 = vrot.lane.b32.xlu0 %v411, 125
        %v486 = vpop.permute.xlu0 %485
        %vm487 = vcmask 1022976
        %v488 = vsel %vm487, %v472, %v474
        %v489 = vsel %vm487, %v476, %v478
        %v490 = vsel %vm487, %v480, %v482
        %v491 = vsel %vm487, %v484, %v486
        %496 = vrot.lane.b32.xlu0 %v404, 124
        %v497 = vpop.permute.xlu0 %496
        %498 = vrot.lane.b32.xlu0 %v408, 124
        %v499 = vpop.permute.xlu0 %498
        %500 = vrot.lane.b32.xlu0 %v405, 124
        %v501 = vpop.permute.xlu0 %500
        %502 = vrot.lane.b32.xlu0 %v409, 124
        %v503 = vpop.permute.xlu0 %502
        %504 = vrot.lane.b32.xlu0 %v406, 124
        %v505 = vpop.permute.xlu0 %504
        %506 = vrot.lane.b32.xlu0 %v410, 124
        %v507 = vpop.permute.xlu0 %506
        %508 = vrot.lane.b32.xlu0 %v407, 124
        %v509 = vpop.permute.xlu0 %508
        %510 = vrot.lane.b32.xlu0 %v411, 124
        %v511 = vpop.permute.xlu0 %510
        %vm512 = vcmask 1014784
        %v513 = vsel %vm512, %v497, %v499
        %v514 = vsel %vm512, %v501, %v503
        %v515 = vsel %vm512, %v505, %v507
        %v516 = vsel %vm512, %v509, %v511
        %v521 = vld [vmem:[%s2] sm:$0xff]
        %v522 = vld [vmem:[%s2 + $0x8] sm:$0xff]
        %v523 = vld [vmem:[%s2 + $0x10] sm:$0xff]
        %v524 = vld [vmem:[%s2 + $0x18] sm:$0xff]
        %v525 = vld [vmem:[%s2 + $0x20] sm:$0xff]
        %v526 = vld [vmem:[%s2 + $0x28] sm:$0xff]
        %v527 = vld [vmem:[%s2 + $0x30] sm:$0xff]
        %v528 = vld [vmem:[%s2 + $0x38] sm:$0xff]
        %v529 = vld [vmem:[%s3] sm:$0xff]
        %v530 = vld [vmem:[%s3 + $0x8] sm:$0xff]
        %v531 = vld [vmem:[%s3 + $0x10] sm:$0xff]
        %v532 = vld [vmem:[%s3 + $0x18] sm:$0xff]
        %534 = vset.pattern.permute.xlu0 0
        %535 = vperm.xlu0 %534, %v529
        %v536 = vpop.permute.xlu0 %535
        %539 = vset.pattern.permute.xlu0 0
        %540 = vperm.xlu0 %539, %v530
        %v541 = vpop.permute.xlu0 %540
        %544 = vset.pattern.permute.xlu0 0
        %545 = vperm.xlu0 %544, %v531
        %v546 = vpop.permute.xlu0 %545
        %549 = vset.pattern.permute.xlu0 0
        %550 = vperm.xlu0 %549, %v532
        %v551 = vpop.permute.xlu0 %550
        %vm553 = vcmask 261120
        %v555 = vsel %vm553, %v522, 0
        %v558 = vsel %vm553, %v524, 0
        %v561 = vsel %vm553, %v526, 0
        %v564 = vsel %vm553, %v528, 0
        %566 = vmatprep.subr.mxu0 0.0
        %567 = vmatpush1.msra.mxu0 %v491
        %568 = vmatprep.subr.mxu0 0.0
        %569 = vmatpush1.msra.mxu0 %v490
        %570 = vmatprep.subr.mxu0 0.0
        %571 = vmatpush1.msra.mxu0 %v489
        %572 = vmatprep.subr.mxu0 0.0
        %573 = vmatpush1.msra.mxu0 %v488
        %574 = vmatprep.subr.mxu0 0.0
        %575 = vmatpush1.msra.mxu0 %v466
        %576 = vmatprep.subr.mxu0 0.0
        %577 = vmatpush1.msra.mxu0 %v465
        %578 = vmatprep.subr.mxu0 0.0
        %579 = vmatpush1.msra.mxu0 %v464
        %580 = vmatprep.subr.mxu0 0.0
        %581 = vmatpush1.msra.mxu0 %v463
        %582 = vmatprep.subr.mxu0 0.0
        %583 = vmatpush1.msra.mxu0 %v441
        %584 = vmatprep.subr.mxu0 0.0
        %585 = vmatpush1.msra.mxu0 %v440
        %586 = vmatprep.subr.mxu0 0.0
        %587 = vmatpush1.msra.mxu0 %v439
        %588 = vmatprep.subr.mxu0 0.0
        %589 = vmatpush1.msra.mxu0 %v438
        %590 = vmatprep.subr.mxu0 0.0
        %591 = vmatpush1.msra.mxu0 %v407
        %592 = vmatprep.subr.mxu0 0.0
        %593 = vmatpush1.msra.mxu0 %v406
        %594 = vmatprep.subr.mxu0 0.0
        %595 = vmatpush1.msra.mxu0 %v405
        %596 = vmatprep.subr.mxu0 0.0
        %597 = vmatpush1.msra.mxu0 %v404
        %598 = vmatprep.subr.mxu0 0.0
        %599 = vmatpush2.msra.mxu0 0.0
        %600 = vmatprep.subr.mxu0 0.0
        %601 = vmatpush2.msra.mxu0 0.0
        %602 = vmatprep.subr.mxu0 0.0
        %603 = vmatpush2.msra.mxu0 0.0
        %604 = vmatprep.subr.mxu0 0.0
        %605 = vmatpush2.msra.mxu0 0.0
        %606 = vmatprep.subr.mxu0 0.0
        %607 = vmatpush2.msra.mxu0 0.0
        %608 = vmatprep.subr.mxu0 0.0
        %609 = vmatpush2.msra.mxu0 0.0
        %610 = vmatprep.subr.mxu0 0.0
        %611 = vmatpush2.msra.mxu0 0.0
        %612 = vmatprep.subr.mxu0 0.0
        %613 = vmatpush2.msra.mxu0 0.0
        %614 = vmatprep.subr.mxu0 0.0
        %615 = vmatpush2.msra.mxu0 0.0
        %616 = vmatprep.subr.mxu0 0.0
        %617 = vmatpush2.msra.mxu0 0.0
        %618 = vmatprep.subr.mxu0 0.0
        %619 = vmatpush2.msra.mxu0 0.0
        %620 = vmatprep.subr.mxu0 0.0
        %621 = vmatpush2.msra.mxu0 0.0
        %622 = vmatprep.subr.mxu0 0.0
        %623 = vmatpush2.msra.mxu0 %v516
        %624 = vmatprep.subr.mxu0 0.0
        %625 = vmatpush2.msra.mxu0 %v515
        %626 = vmatprep.subr.mxu0 0.0
        %627 = vmatpush2.msra.mxu0 %v514
        %628 = vmatprep.subr.mxu0 0.0
        %629 = vmatpush2.msra.mxu0 %v513
        %630 = vmatprep.mubr.f32.mxu0 %v555
        %631 = vmatmul.mubr.f32.gmra.mxu0 %v521
        %v632 = vpop.f32.mrf.mxu0
        %v633 = vadd.f32 %v536, %v632
        %v634 = vpop.f32.mrf.mxu0
        %635 = vmatprep.mubr.f32.mxu0 %v558
        %636 = vmatmul.mubr.f32.gmra.mxu0 %v523
        %v637 = vpop.f32.mrf.mxu0
        %v638 = vadd.f32 %v541, %v637
        %v639 = vpop.f32.mrf.mxu0
        %640 = vmatprep.mubr.f32.mxu0 %v561
        %641 = vmatmul.mubr.f32.gmra.mxu0 %v525
        %v642 = vpop.f32.mrf.mxu0
        %v643 = vadd.f32 %v546, %v642
        %v644 = vpop.f32.mrf.mxu0
        %645 = vmatprep.mubr.f32.mxu0 %v564
        %646 = vmatmul.mubr.f32.gmra.mxu0 %v527
        %v647 = vpop.f32.mrf.mxu0
        %v648 = vadd.f32 %v551, %v647
        %v649 = vpop.f32.mrf.mxu0
        %650 = vdwg.mxu0
        %v651 = vmax.f32 %v633, 0.0
        %v652 = vmax.f32 %v638, 0.0
        %v653 = vmax.f32 %v643, 0.0
        %v654 = vmax.f32 %v648, 0.0
        %v655 = vadd.f32 %v651, %v652
        %v656 = vadd.f32 %v655, %v653
        %v657 = vadd.f32 %v656, %v654
        %v658 = vrot.slane %v657, 4
        %v659 = vadd.f32 %v657, %v658
        %v660 = vrot.slane %v659, 2
        %v661 = vadd.f32 %v659, %v660
        %v662 = vrot.slane %v661, 1
        %v663 = vadd.f32 %v661, %v662
        %v664 = vmul.f32 %v663, 0.03125
        %v665 = vsub.f32 %v651, %v664
        %v666 = vsub.f32 %v652, %v664
        %v667 = vsub.f32 %v653, %v664
        %v668 = vsub.f32 %v654, %v664
        %v669 = vmul.f32 %v665, %v665
        %v670 = vmul.f32 %v666, %v666
        %v671 = vmul.f32 %v667, %v667
        %v672 = vmul.f32 %v668, %v668
        %v673 = vadd.f32 %v669, %v670
        %v674 = vadd.f32 %v673, %v671
        %v675 = vadd.f32 %v674, %v672
        %v676 = vrot.slane %v675, 4
        %v677 = vadd.f32 %v675, %v676
        %v678 = vrot.slane %v677, 2
        %v679 = vadd.f32 %v677, %v678
        %v680 = vrot.slane %v679, 1
        %v681 = vadd.f32 %v679, %v680
        %v682 = vmul.f32 %v681, 0.03125
        %v683 = vadd.f32 %v682, 1e-05
        %v684 = vrsqrt.pop %v683
        %v685 = vmul.f32 %v665, %v684
        %v686 = vmul.f32 %v666, %v684
        %v687 = vmul.f32 %v667, %v684
        %v688 = vmul.f32 %v668, %v684
        %v689 = vld [vmem:[%s4] sm:$0xff]
        %v690 = vld [vmem:[%s4 + $0x8] sm:$0xff]
        %v691 = vld [vmem:[%s4 + $0x10] sm:$0xff]
        %v692 = vld [vmem:[%s4 + $0x18] sm:$0xff]
        %694 = vset.pattern.permute.xlu0 0
        %695 = vperm.xlu0 %694, %v689
        %v696 = vpop.permute.xlu0 %695
        %699 = vset.pattern.permute.xlu0 0
        %700 = vperm.xlu0 %699, %v690
        %v701 = vpop.permute.xlu0 %700
        %704 = vset.pattern.permute.xlu0 0
        %705 = vperm.xlu0 %704, %v691
        %v706 = vpop.permute.xlu0 %705
        %709 = vset.pattern.permute.xlu0 0
        %710 = vperm.xlu0 %709, %v692
        %v711 = vpop.permute.xlu0 %710
        %v713 = vmul.f32 %v685, %v696
        %v714 = vmul.f32 %v686, %v701
        %v715 = vmul.f32 %v687, %v706
        %v716 = vmul.f32 %v688, %v711
        %v717 = vld [vmem:[%s5] sm:$0xff]
        %v718 = vld [vmem:[%s5 + $0x8] sm:$0xff]
        %v719 = vld [vmem:[%s5 + $0x10] sm:$0xff]
        %v720 = vld [vmem:[%s5 + $0x18] sm:$0xff]
        %722 = vset.pattern.permute.xlu0 0
        %723 = vperm.xlu0 %722, %v717
        %v724 = vpop.permute.xlu0 %723
        %727 = vset.pattern.permute.xlu0 0
        %728 = vperm.xlu0 %727, %v718
        %v729 = vpop.permute.xlu0 %728
        %732 = vset.pattern.permute.xlu0 0
        %733 = vperm.xlu0 %732, %v719
        %v734 = vpop.permute.xlu0 %733
        %737 = vset.pattern.permute.xlu0 0
        %738 = vperm.xlu0 %737, %v720
        %v739 = vpop.permute.xlu0 %738
        %v741 = vadd.f32 %v713, %v724
        %v742 = vadd.f32 %v714, %v729
        %v743 = vadd.f32 %v715, %v734
        %v744 = vadd.f32 %v716, %v739
        %v746 = vlaneseq
        %v747 = vshrl.u32 %v746, 7
        %v748 = vsub.s32 0, %v747
        %v749 = vrot.slane %v412, %v748
        %v751 = vmul.f32 %v741, %v749
        %v752 = vmul.f32 %v742, %v749
        %v753 = vmul.f32 %v743, %v749
        %v754 = vmul.f32 %v744, %v749
        %755 = vst [vmem:[%s387] sm:$0xff] %v751
        %756 = vst [vmem:[%s387 + $0x8] sm:$0xff] %v752
        %757 = vst [vmem:[%s387 + $0x10] sm:$0xff] %v753
        %758 = vst [vmem:[%s387 + $0x18] sm:$0xff] %v754
        %s759 = sand.u32 %s211, 1
        %s760 = scalar_lea.sflag [#allocation4], %s759
        %s761 = sand.u32 %s211, 1
        %s762 = smul.addr %s761, 32
        %s763 = scalar_lea.vmem [#allocation3], %s762
        // Predicated region
        $region87: #{tpu_custom_call.1} parent=81 // pred_check
          %p764 = pneg %p221
        $region88: #{tpu_custom_call.1} parent=81 // pred_check_branch
          %766 = sbr.rel (%p764) target = $region90
        $region89: #{tpu_custom_call.1} parent=81 // pred_region
          %s768 = ssub.s32 512, 512
          %769 = vsyncadd %s760, %s768
          %s770 = smul.addr %s25, 8
          %s771 = sadd.s32 %s26, %s770
          %s772 = smul.addr %s771, 128
          %s773 = scalar_lea.hbm %s7, %s772
          %s774 = sshll.u32 %s763, 4
          %s775 = int_to_ptr.vmem [resolvable:$true] %s774
          %780 = dma.vmem_to_hbm [thread:$0]  %s775, 512, %s773, %s760, 128, 256, 8
        $region90: #{tpu_custom_call.1} parent=81 // pred_fallthru
          _
      $region82: #{tpu_custom_call.1} parent=5 // pred_fallthru
        _
      %p781 = scmp.le.s32.totalorder 2, %s16
      // Predicated region
      $region91: #{tpu_custom_call.1} parent=5 // pred_check
        %p782 = pneg %p781
      $region92: #{tpu_custom_call.1} parent=5 // pred_check_branch
        %784 = sbr.rel (%p782) target = $region94
      $region93: #{tpu_custom_call.1} parent=5 // pred_region
        %s785 = ssub.s32 %s16, 2
        // Predicated region
        $region95: #{tpu_custom_call.1} parent=93 // pred_check
          %p786 = pneg %p227
        $region96: #{tpu_custom_call.1} parent=93 // pred_check_branch
          %788 = sbr.rel (%p786) target = $region98
        $region97: #{tpu_custom_call.1} parent=93 // pred_region
          %s789 = sand.u32 %s212, 1
          %s790 = scalar_lea.sflag [#allocation4], %s789
          %s791 = sand.u32 %s212, 1
          %s792 = smul.addr %s791, 32
          %s793 = scalar_lea.vmem [#allocation3], %s792
          %794 = dma.done %s790, 512
        $region98: #{tpu_custom_call.1} parent=93 // pred_fallthru
          _
      $region94: #{tpu_custom_call.1} parent=5 // pred_fallthru
        _
    $region6: #{tpu_custom_call.1} parent=1 // loop_footer
      %s20 = sadd.s32 1, %s16
    $region7: #{tpu_custom_call.1} parent=1 // loop_footer_branch
      %15 = sbr.rel target = $region3
    $region8: #{tpu_custom_call.1} parent=1 // loop_exit
      _
    %795 = vsyncpa [#allocation4], 1
    %s796 = scalar_lea.sflag [#allocation4], 1
    %797 = vsyncpa %s796, 1

</llo_original>
